<compile_context>
chip_gen: v7x
topology: tpu7x:2x2x1
jax: 0.10.0
libtpu: 0.0.40
codegen_flags: <defaults>
</compile_context>

<pallas_src>
import functools
import math

import jax
import jax.numpy as jnp
from jax.experimental import pallas as pl
from jax.experimental.pallas import tpu as pltpu

_MATMUL_DTYPE = jnp.bfloat16   # MXU operand dtype; accumulation is always f32
_LN_EPS = 1e-6                 # PreSumm overrides nn.LayerNorm's default 1e-5 with eps=1e-6


def _gelu(x):
    # PreSumm gelu (tanh approximation), computed in f32 (tanh rides the EUP).
    return 0.5 * x * (1.0 + jnp.tanh(math.sqrt(2.0 / math.pi) * (x + 0.044715 * x * x * x)))


def _maybe_vmem_limit(est_bytes):
    """Raise the 32 MiB default scoped-VMEM limit only when the estimated footprint needs
    it; stay below v7x's 64 MiB physical VMEM."""
    default = 32 * 1024 * 1024
    if est_bytes <= default - (2 << 20):
        return None
    return int(min(est_bytes + (4 << 20), 60 * 1024 * 1024))


def _row_tile(n, d, f):
    """Largest row tile <= 512 dividing n whose fused out-proj+FFN working set stays inside
    a conservative (v7x-safe) VMEM budget.  ~0.35us/grid-step overhead favors big tiles;
    256-512 already sits near the HBM roofline.  (On v7x, a grid with an even number of
    steps feeds both TensorCores; for realistic N = B*S this is automatic.)"""
    budget = 20 * 1024 * 1024
    cands = [t for t in range(min(n, 512), 0, -1)
             if n % t == 0 and (t % 8 == 0 or t == n)]
    for t in cands:
        work = 2 * t * d * (2 + 4 + 4) + 2 * t * (f + d) * 4  # I/O double-buffers + ln/h temps
        if work <= budget:
            return t
    return cands[-1] if cands else n


# ---------------------------------------------------------------------------
# K1: per-batch fused (pre-LayerNorm + QKV projection + masked MHA).
# ---------------------------------------------------------------------------
def _attn_kernel(x_ref, mask_ref, wqkv_ref, bqkv_ref, g_ref, beta_ref, ctx_ref, *,
                 heads, do_norm, eps):
    S, D = x_ref.shape
    dh = D // heads

    x = x_ref[...].astype(jnp.float32)                              # (S, D)
    if do_norm:  # static Python branch (iter != 0)
        mu = jnp.mean(x, axis=-1, keepdims=True)
        var = jnp.mean(jnp.square(x - mu), axis=-1, keepdims=True)
        x = (x - mu) * jax.lax.rsqrt(var + eps) * g_ref[...] + beta_ref[...]

    # Fused QKV projection (bf16 operands, f32 accumulation); 1/sqrt(d_head) is folded
    # into W_q / b_q at prep time so no extra scale op is needed.
    qkv = jnp.dot(x.astype(_MATMUL_DTYPE), wqkv_ref[...],
                  preferred_element_type=jnp.float32) + bqkv_ref[...]   # (S, 3D) f32

    masked = mask_ref[...] > 0.5                                    # (1, S): padded keys

    ctx_heads = []
    for h in range(heads):                                          # static unroll over heads
        qh = qkv[:, h * dh:(h + 1) * dh].astype(_MATMUL_DTYPE)              # (S, dh)
        kh = qkv[:, D + h * dh:D + (h + 1) * dh].astype(_MATMUL_DTYPE)      # (S, dh)
        vh = qkv[:, 2 * D + h * dh:2 * D + (h + 1) * dh].astype(_MATMUL_DTYPE)

        # scores = q @ k.T without an explicit transpose (contract last dims on the MXU).
        s = jax.lax.dot_general(qh, kh, (((1,), (1,)), ((), ())),
                                preferred_element_type=jnp.float32)         # (S, S) f32
        s = jnp.where(masked, -1e18, s)                              # masked_fill(mask, -1e18)
        m = jnp.max(s, axis=-1, keepdims=True)
        p = jnp.exp(s - m)                                           # f32 (EUP)
        l = jnp.sum(p, axis=-1, keepdims=True)                       # (S, 1)
        c = jnp.dot(p.astype(_MATMUL_DTYPE), vh,
                    preferred_element_type=jnp.float32)              # (S, dh) f32
        # Normalize the (S, dh) context, not the (S, S) prob matrix; approx recip -> EUP.
        ctx_heads.append(c * pl.reciprocal(l, approx=True))

    # TODO(synk): training-mode attention dropout (pltpu.prng_seed + stateful_bernoulli);
    # eval semantics -> identity.
    # TODO(synk): for very long S, tile the key axis with an online-softmax (flash-style)
    # inner loop so the per-head (S, S) scores never materialize at full length.
    ctx_ref[...] = jnp.concatenate(ctx_heads, axis=-1).astype(ctx_ref.dtype)  # (S, D) lane-dense


# ---------------------------------------------------------------------------
# K2: output projection + residual + FFN (LN -> W1 -> gelu -> W2 -> residual), fused.
# ---------------------------------------------------------------------------
def _out_ffn_kernel(ctx_ref, x_ref, wo_ref, bo_ref, g_ref, beta_ref,
                    w1_ref, b1_ref, w2_ref, b2_ref, y_ref, *, eps):
    ctx = ctx_ref[...]                                               # (Tn, D) bf16
    x = x_ref[...].astype(jnp.float32)                               # residual (original inputs)
    attn_out = jnp.dot(ctx, wo_ref[...], preferred_element_type=jnp.float32) + bo_ref[...]
    res = attn_out + x                                               # dropout(context)+inputs (eval)
    mu = jnp.mean(res, axis=-1, keepdims=True)
    var = jnp.mean(jnp.square(res - mu), axis=-1, keepdims=True)
    ln = (res - mu) * jax.lax.rsqrt(var + eps) * g_ref[...] + beta_ref[...]
    h = _gelu(jnp.dot(ln.astype(_MATMUL_DTYPE), w1_ref[...],
                      preferred_element_type=jnp.float32) + b1_ref[...])
    y = jnp.dot(h.astype(_MATMUL_DTYPE), w2_ref[...],
                preferred_element_type=jnp.float32) + b2_ref[...] + res
    y_ref[...] = y.astype(y_ref.dtype)


# ---------------------------------------------------------------------------
# Parameter prep (hoisted out of the per-step forward)
# ---------------------------------------------------------------------------
def prepare_params(params, *, matmul_dtype=_MATMUL_DTYPE):
    """One-time per-checkpoint prep: QKV concat + 1/sqrt(d_head) folding, bias/LN reshapes,
    bf16 weight casts.  Do this at parameter-load time, not inside the forward."""
    H = params['heads']
    D = params['wq'].shape[0]
    dh = D // H
    scale = 1.0 / math.sqrt(dh)
    f32 = jnp.float32
    return {
        'heads': H,
        'd_model': D,
        'd_ff': params['w1'].shape[1],
        'w_qkv': jnp.concatenate([params['wq'] * scale, params['wk'], params['wv']],
                                 axis=1).astype(matmul_dtype),
        'b_qkv': jnp.concatenate([params['bq'] * scale, params['bk'], params['bv']],
                                 axis=0)[None, :].astype(f32),
        'ln_attn_g': params['ln_attn_g'][None, :].astype(f32),
        'ln_attn_b': params['ln_attn_b'][None, :].astype(f32),
        'wo': params['wo'].astype(matmul_dtype),
        'bo': params['bo'][None, :].astype(f32),
        'ln_ffn_g': params['ln_ffn_g'][None, :].astype(f32),
        'ln_ffn_b': params['ln_ffn_b'][None, :].astype(f32),
        'w1': params['w1'].astype(matmul_dtype),
        'b1': params['b1'][None, :].astype(f32),
        'w2': params['w2'].astype(matmul_dtype),
        'b2': params['b2'][None, :].astype(f32),
    }


# ---------------------------------------------------------------------------
# Wrapper
# ---------------------------------------------------------------------------
def transformer_encoder_layer_forward(iter_, query, inputs, mask, prepped, *, eps=_LN_EPS):
    """Pallas forward of TransformerEncoderLayer (eval mode; dropout = identity).

    iter_ must be a Python int: the `if iter != 0` pre-LayerNorm branch is resolved at
    trace time (a traced iter would need a lax.cond and would defeat the fused LN).
    inputs: (B, S, D) f32.  mask: (B, S), nonzero = padded key position.
    prepped: output of prepare_params().  `query` is unused (matches the module signature).
    """
    del query  # unused by the reference module's forward
    B, S, D = inputs.shape
    H = prepped['heads']
    F = prepped['d_ff']
    assert D % H == 0, "d_model must be divisible by heads"
    N = B * S
    do_norm = (int(iter_) != 0)

    mask3 = (mask != 0).astype(jnp.float32).reshape(B, 1, S)
    const = dict(pipeline_mode=pl.Buffered(1))   # single-buffer resident weights/biases

    # --- K1: fused pre-LN + QKV + masked MHA (per batch; grid feeds both v7x TCs for B>=2).
    attn_flops = 6 * N * D * D + 4 * N * S * D
    attn_trans = B * H * S * S + B * H * S + (B * S if do_norm else 0)
    w_bytes = (prepped['w_qkv'].nbytes + prepped['b_qkv'].nbytes
               + prepped['ln_attn_g'].nbytes + prepped['ln_attn_b'].nbytes)
    attn_bytes = inputs.nbytes + mask3.nbytes + w_bytes + N * D * 2
    attn_vmem = (w_bytes + 2 * (S * D * 4 + S * 4) + 2 * S * D * 2
                 + S * 3 * D * 4 + 2 * S * S * 4 + 2 * S * D * 4)

    ctx = pl.pallas_call(
        functools.partial(_attn_kernel, heads=H, do_norm=do_norm, eps=eps),
        out_shape=jax.ShapeDtypeStruct((B, S, D), _MATMUL_DTYPE),
        grid_spec=pltpu.PrefetchScalarGridSpec(
            num_scalar_prefetch=0,
            grid=(B,),
            in_specs=[
                pl.BlockSpec((pl.Squeezed(), S, D), lambda b: (b, 0, 0)),
                pl.BlockSpec((pl.Squeezed(), 1, S), lambda b: (b, 0, 0)),
                pl.BlockSpec((D, 3 * D), lambda b: (0, 0), **const),
                pl.BlockSpec((1, 3 * D), lambda b: (0, 0), **const),
                pl.BlockSpec((1, D), lambda b: (0, 0), **const),
                pl.BlockSpec((1, D), lambda b: (0, 0), **const),
            ],
            out_specs=pl.BlockSpec((pl.Squeezed(), S, D), lambda b: (b, 0, 0)),
        ),
        compiler_params=pltpu.CompilerParams(
            dimension_semantics=("parallel",),
            vmem_limit_bytes=_maybe_vmem_limit(attn_vmem)),
        cost_estimate=pl.CostEstimate(flops=int(attn_flops),
                                      transcendentals=int(attn_trans),
                                      bytes_accessed=int(attn_bytes)),
    )(inputs, mask3, prepped['w_qkv'], prepped['b_qkv'],
      prepped['ln_attn_g'], prepped['ln_attn_b'])

    # --- K2: out-proj + residual + FFN, fused over flattened rows (lane-dense, no transposes).
    tn = _row_tile(N, D, F)
    x2 = inputs.reshape(N, D)          # contiguous reshape: free
    ctx2 = ctx.reshape(N, D)           # contiguous reshape: free

    ffn_flops = 2 * N * D * D + 4 * N * D * F
    ffn_trans = N * F + N
    w_bytes_ffn = (prepped['wo'].nbytes + prepped['bo'].nbytes
                   + prepped['ln_ffn_g'].nbytes + prepped['ln_ffn_b'].nbytes
                   + prepped['w1'].nbytes + prepped['b1'].nbytes
                   + prepped['w2'].nbytes + prepped['b2'].nbytes)
    ffn_bytes = ctx2.nbytes + x2.nbytes + w_bytes_ffn + N * D * 4
    ffn_vmem = (w_bytes_ffn + 2 * tn * D * (2 + 4 + 4) + 2 * tn * (F + D) * 4)

    y = pl.pallas_call(
        functools.partial(_out_ffn_kernel, eps=eps),
        out_shape=jax.ShapeDtypeStruct((N, D), inputs.dtype),
        grid_spec=pltpu.PrefetchScalarGridSpec(
            num_scalar_prefetch=0,
            grid=(N // tn,),
            in_specs=[
                pl.BlockSpec((tn, D), lambda i: (i, 0)),
                pl.BlockSpec((tn, D), lambda i: (i, 0)),
                pl.BlockSpec((D, D), lambda i: (0, 0), **const),
                pl.BlockSpec((1, D), lambda i: (0, 0), **const),
                pl.BlockSpec((1, D), lambda i: (0, 0), **const),
                pl.BlockSpec((1, D), lambda i: (0, 0), **const),
                pl.BlockSpec((D, F), lambda i: (0, 0), **const),
                pl.BlockSpec((1, F), lambda i: (0, 0), **const),
                pl.BlockSpec((F, D), lambda i: (0, 0), **const),
                pl.BlockSpec((1, D), lambda i: (0, 0), **const),
            ],
            out_specs=pl.BlockSpec((tn, D), lambda i: (i, 0)),
        ),
        compiler_params=pltpu.CompilerParams(
            dimension_semantics=("parallel",),
            vmem_limit_bytes=_maybe_vmem_limit(ffn_vmem)),
        cost_estimate=pl.CostEstimate(flops=int(ffn_flops),
                                      transcendentals=int(ffn_trans),
                                      bytes_accessed=int(ffn_bytes)),
    )(ctx2, x2,
      prepped['wo'], prepped['bo'], prepped['ln_ffn_g'], prepped['ln_ffn_b'],
      prepped['w1'], prepped['b1'], prepped['w2'], prepped['b2'])

    return y.reshape(B, S, D)


# ---------------------------------------------------------------------------
# Pure-JAX f32 reference (mirrors the PyTorch forward, eval mode)
# ---------------------------------------------------------------------------
def _layer_norm_ref(x, g, b, eps=_LN_EPS):
    mu = jnp.mean(x, axis=-1, keepdims=True)
    var = jnp.mean(jnp.square(x - mu), axis=-1, keepdims=True)
    return (x - mu) / jnp.sqrt(var + eps) * g + b


def reference_forward(iter_, inputs, mask, params):
    B, S, D = inputs.shape
    H = params['heads']
    dh = D // H
    xn = _layer_norm_ref(inputs, params['ln_attn_g'], params['ln_attn_b']) if iter_ != 0 else inputs
    q = xn @ params['wq'] + params['bq']
    k = xn @ params['wk'] + params['bk']
    v = xn @ params['wv'] + params['bv']

    def to_heads(t):
        return t.reshape(B, S, H, dh).transpose(0, 2, 1, 3)

    qh = to_heads(q) / math.sqrt(dh)
    kh, vh = to_heads(k), to_heads(v)
    scores = jnp.einsum('bhqd,bhkd->bhqk', qh, kh)
    scores = jnp.where(mask[:, None, None, :] > 0.5, -1e18, scores)
    attn = jax.nn.softmax(scores, axis=-1)
    ctx = jnp.einsum('bhqk,bhkd->bhqd', attn, vh).transpose(0, 2, 1, 3).reshape(B, S, D)
    context = ctx @ params['wo'] + params['bo']
    out = context + inputs
    ln = _layer_norm_ref(out, params['ln_ffn_g'], params['ln_ffn_b'])
    h = _gelu(ln @ params['w1'] + params['b1'])
    return h @ params['w2'] + params['b2'] + out


if __name__ == "__main__":
    B, S, D_MODEL, HEADS, D_FF = 2, 8, 32, 4, 64
    DROPOUT = 0.1  # eval mode -> identity (see TODO in _attn_kernel)

    key = jax.random.PRNGKey(0)
    keys = jax.random.split(key, 18)

    def init(k, shape, fan_in):
        return jax.random.normal(k, shape, dtype=jnp.float32) / math.sqrt(fan_in)

    params = {
        'heads': HEADS,
        'wq': init(keys[0], (D_MODEL, D_MODEL), D_MODEL),
        'bq': init(keys[1], (D_MODEL,), D_MODEL),
        'wk': init(keys[2], (D_MODEL, D_MODEL), D_MODEL),
        'bk': init(keys[3], (D_MODEL,), D_MODEL),
        'wv': init(keys[4], (D_MODEL, D_MODEL), D_MODEL),
        'bv': init(keys[5], (D_MODEL,), D_MODEL),
        'wo': init(keys[6], (D_MODEL, D_MODEL), D_MODEL),
        'bo': init(keys[7], (D_MODEL,), D_MODEL),
        'w1': init(keys[8], (D_MODEL, D_FF), D_MODEL),
        'b1': init(keys[9], (D_FF,), D_MODEL),
        'w2': init(keys[10], (D_FF, D_MODEL), D_FF),
        'b2': init(keys[11], (D_MODEL,), D_FF),
        'ln_attn_g': 1.0 + 0.1 * jax.random.normal(keys[12], (D_MODEL,), dtype=jnp.float32),
        'ln_attn_b': 0.1 * jax.random.normal(keys[13], (D_MODEL,), dtype=jnp.float32),
        'ln_ffn_g': 1.0 + 0.1 * jax.random.normal(keys[14], (D_MODEL,), dtype=jnp.float32),
        'ln_ffn_b': 0.1 * jax.random.normal(keys[15], (D_MODEL,), dtype=jnp.float32),
    }

    inputs = jax.random.normal(keys[16], (B, S, D_MODEL), dtype=jnp.float32)
    query = inputs  # unused by the module's forward
    mask = jnp.zeros((B, S), dtype=jnp.float32).at[1, -2:].set(1.0)  # pad last 2 keys of batch 1
    iter_ = 1  # exercise the pre-LayerNorm branch

    prepped = prepare_params(params)  # hoisted weight prep (done once, not per forward)
    out = transformer_encoder_layer_forward(iter_, query, inputs, mask, prepped)
    out = jax.block_until_ready(out)

    ref = reference_forward(iter_, inputs, mask, params)
    assert out.shape == (B, S, D_MODEL)
    max_err = float(jnp.max(jnp.abs(out - ref)))
    # bf16 MXU operands + approx reciprocal -> compare against the f32 reference with a
    # correspondingly looser tolerance.
    assert jnp.allclose(out, ref, atol=5e-2, rtol=5e-2), f"max abs err {max_err}"

    print("KERNEL_OK")
</pallas_src>

<mosaic_0001>
module attributes {stable_mosaic.version = 11 : i64} {
  func.func @_attn_kernel(%arg0: i32, %arg1: memref<1x8x32xf32, #tpu.memory_space<vmem>>, %arg2: memref<1x1x8xf32, #tpu.memory_space<vmem>>, %arg3: memref<32x96xbf16, #tpu.memory_space<vmem>>, %arg4: memref<1x96xf32, #tpu.memory_space<vmem>>, %arg5: memref<1x32xf32, #tpu.memory_space<vmem>>, %arg6: memref<1x32xf32, #tpu.memory_space<vmem>>, %arg7: memref<1x8x32xbf16, #tpu.memory_space<vmem>>) attributes {dimension_semantics = [#tpu.dimension_semantics<parallel>], iteration_bounds = array<i64: 2>, scalar_prefetch = 0 : i64, scratch_operands = 0 : i64, tpu.core_type = #tpu.core_type<tc>, window_params = [{transform_indices = @transform_0, window_bounds = array<i64: 1, 8, 32>}, {transform_indices = @transform_1, window_bounds = array<i64: 1, 1, 8>}, {pipeline_mode = #tpu.pipeline_mode<synchronous>, transform_indices = @transform_2, window_bounds = array<i64: 32, 96>}, {pipeline_mode = #tpu.pipeline_mode<synchronous>, transform_indices = @transform_3, window_bounds = array<i64: 1, 96>}, {pipeline_mode = #tpu.pipeline_mode<synchronous>, transform_indices = @transform_4, window_bounds = array<i64: 1, 32>}, {pipeline_mode = #tpu.pipeline_mode<synchronous>, transform_indices = @transform_5, window_bounds = array<i64: 1, 32>}, {transform_indices = @transform_6, window_bounds = array<i64: 1, 8, 32>}]} {
    %c0 = arith.constant 0 : index
    %c0_0 = arith.constant 0 : index
    %c0_1 = arith.constant 0 : index
    %0 = vector.load %arg1[%c0, %c0_0, %c0_1] : memref<1x8x32xf32, #tpu.memory_space<vmem>>, vector<1x8x32xf32>
    %1 = vector.shape_cast %0 : vector<1x8x32xf32> to vector<8x32xf32>
    %cst = arith.constant dense<0.000000e+00> : vector<8xf32>
    %2 = vector.multi_reduction <add>, %1, %cst [1] : vector<8x32xf32> to vector<8xf32>
    %3 = vector.shape_cast %2 : vector<8xf32> to vector<8x1xf32>
    %cst_2 = arith.constant 3.200000e+01 : f32
    %4 = vector.broadcast %cst_2 : f32 to vector<8x1xf32>
    %5 = arith.divf %3, %4 : vector<8x1xf32>
    %6 = vector.broadcast %5 : vector<8x1xf32> to vector<8x32xf32>
    %7 = arith.subf %1, %6 : vector<8x32xf32>
    %8 = arith.mulf %7, %7 : vector<8x32xf32>
    %cst_3 = arith.constant dense<0.000000e+00> : vector<8xf32>
    %9 = vector.multi_reduction <add>, %8, %cst_3 [1] : vector<8x32xf32> to vector<8xf32>
    %10 = vector.shape_cast %9 : vector<8xf32> to vector<8x1xf32>
    %cst_4 = arith.constant 3.200000e+01 : f32
    %11 = vector.broadcast %cst_4 : f32 to vector<8x1xf32>
    %12 = arith.divf %10, %11 : vector<8x1xf32>
    %13 = vector.broadcast %5 : vector<8x1xf32> to vector<8x32xf32>
    %14 = arith.subf %1, %13 : vector<8x32xf32>
    %cst_5 = arith.constant 9.99999997E-7 : f32
    %15 = vector.broadcast %cst_5 : f32 to vector<8x1xf32>
    %16 = arith.addf %12, %15 : vector<8x1xf32>
    %17 = math.rsqrt %16 : vector<8x1xf32>
    %18 = vector.broadcast %17 : vector<8x1xf32> to vector<8x32xf32>
    %19 = arith.mulf %14, %18 : vector<8x32xf32>
    %c0_6 = arith.constant 0 : index
    %c0_7 = arith.constant 0 : index
    %20 = vector.load %arg5[%c0_6, %c0_7] : memref<1x32xf32, #tpu.memory_space<vmem>>, vector<1x32xf32>
    %21 = vector.broadcast %20 : vector<1x32xf32> to vector<8x32xf32>
    %22 = arith.mulf %19, %21 : vector<8x32xf32>
    %c0_8 = arith.constant 0 : index
    %c0_9 = arith.constant 0 : index
    %23 = vector.load %arg6[%c0_8, %c0_9] : memref<1x32xf32, #tpu.memory_space<vmem>>, vector<1x32xf32>
    %24 = vector.broadcast %23 : vector<1x32xf32> to vector<8x32xf32>
    %25 = arith.addf %22, %24 : vector<8x32xf32>
    %26 = arith.truncf %25 : vector<8x32xf32> to vector<8x32xbf16>
    %c0_10 = arith.constant 0 : index
    %c0_11 = arith.constant 0 : index
    %27 = vector.load %arg3[%c0_10, %c0_11] : memref<32x96xbf16, #tpu.memory_space<vmem>>, vector<32x96xbf16>
    %cst_12 = arith.constant dense<0.000000e+00> : vector<8x96xf32>
    %28 = tpu.matmul %26, %27, %cst_12 {dimension_numbers = #tpu.dot_dimension_numbers<[1], [0], [0], [1], [0, 0, 1, 1], [], []>} : vector<8x32xbf16>, vector<32x96xbf16>, vector<8x96xf32> -> vector<8x96xf32>
    %c0_13 = arith.constant 0 : index
    %c0_14 = arith.constant 0 : index
    %29 = vector.load %arg4[%c0_13, %c0_14] : memref<1x96xf32, #tpu.memory_space<vmem>>, vector<1x96xf32>
    %30 = vector.broadcast %29 : vector<1x96xf32> to vector<8x96xf32>
    %31 = arith.addf %28, %30 : vector<8x96xf32>
    %c0_15 = arith.constant 0 : index
    %c0_16 = arith.constant 0 : index
    %c0_17 = arith.constant 0 : index
    %32 = vector.load %arg2[%c0_15, %c0_16, %c0_17] : memref<1x1x8xf32, #tpu.memory_space<vmem>>, vector<1x1x8xf32>
    %33 = vector.shape_cast %32 : vector<1x1x8xf32> to vector<1x8xf32>
    %cst_18 = arith.constant 5.000000e-01 : f32
    %34 = vector.broadcast %cst_18 : f32 to vector<1x8xf32>
    %35 = arith.cmpf ogt, %33, %34 : vector<1x8xf32>
    %36 = vector.extract_strided_slice %31 {offsets = [0, 0], sizes = [8, 8], strides = [1, 1]} : vector<8x96xf32> to vector<8x8xf32>
    %37 = arith.truncf %36 : vector<8x8xf32> to vector<8x8xbf16>
    %38 = vector.extract_strided_slice %31 {offsets = [0, 32], sizes = [8, 8], strides = [1, 1]} : vector<8x96xf32> to vector<8x8xf32>
    %39 = arith.truncf %38 : vector<8x8xf32> to vector<8x8xbf16>
    %40 = vector.extract_strided_slice %31 {offsets = [0, 64], sizes = [8, 8], strides = [1, 1]} : vector<8x96xf32> to vector<8x8xf32>
    %41 = arith.truncf %40 : vector<8x8xf32> to vector<8x8xbf16>
    %cst_19 = arith.constant dense<0.000000e+00> : vector<8x8xf32>
    %42 = tpu.matmul %37, %39, %cst_19 {dimension_numbers = #tpu.dot_dimension_numbers<[1], [1], [0], [0], [0, 0, 1, 0], [], []>} : vector<8x8xbf16>, vector<8x8xbf16>, vector<8x8xf32> -> vector<8x8xf32>
    %cst_20 = arith.constant -9.99999984E+17 : f32
    %43 = vector.shape_cast %35 : vector<1x8xi1> to vector<1x8xi1>
    %44 = vector.broadcast %43 : vector<1x8xi1> to vector<8x8xi1>
    %45 = vector.broadcast %cst_20 : f32 to vector<8x8xf32>
    %46 = arith.select %44, %45, %42 : vector<8x8xi1>, vector<8x8xf32>
    %cst_21 = arith.constant dense<0xFF800000> : vector<8xf32>
    %47 = vector.multi_reduction <maximumf>, %46, %cst_21 [1] : vector<8x8xf32> to vector<8xf32>
    %48 = vector.shape_cast %47 : vector<8xf32> to vector<8x1xf32>
    %49 = vector.broadcast %48 : vector<8x1xf32> to vector<8x8xf32>
    %50 = arith.subf %46, %49 : vector<8x8xf32>
    %51 = math.exp %50 : vector<8x8xf32>
    %cst_22 = arith.constant dense<0.000000e+00> : vector<8xf32>
    %52 = vector.multi_reduction <add>, %51, %cst_22 [1] : vector<8x8xf32> to vector<8xf32>
    %53 = vector.shape_cast %52 : vector<8xf32> to vector<8x1xf32>
    %54 = arith.truncf %51 : vector<8x8xf32> to vector<8x8xbf16>
    %cst_23 = arith.constant dense<0.000000e+00> : vector<8x8xf32>
    %55 = tpu.matmul %54, %41, %cst_23 {dimension_numbers = #tpu.dot_dimension_numbers<[1], [0], [0], [1], [0, 0, 1, 1], [], []>} : vector<8x8xbf16>, vector<8x8xbf16>, vector<8x8xf32> -> vector<8x8xf32>
    %56 = tpu.reciprocal %53 {approx = true} : vector<8x1xf32> -> vector<8x1xf32>
    %57 = vector.broadcast %56 : vector<8x1xf32> to vector<8x8xf32>
    %58 = arith.mulf %55, %57 : vector<8x8xf32>
    %59 = vector.extract_strided_slice %31 {offsets = [0, 8], sizes = [8, 8], strides = [1, 1]} : vector<8x96xf32> to vector<8x8xf32>
    %60 = arith.truncf %59 : vector<8x8xf32> to vector<8x8xbf16>
    %61 = vector.extract_strided_slice %31 {offsets = [0, 40], sizes = [8, 8], strides = [1, 1]} : vector<8x96xf32> to vector<8x8xf32>
    %62 = arith.truncf %61 : vector<8x8xf32> to vector<8x8xbf16>
    %63 = vector.extract_strided_slice %31 {offsets = [0, 72], sizes = [8, 8], strides = [1, 1]} : vector<8x96xf32> to vector<8x8xf32>
    %64 = arith.truncf %63 : vector<8x8xf32> to vector<8x8xbf16>
    %cst_24 = arith.constant dense<0.000000e+00> : vector<8x8xf32>
    %65 = tpu.matmul %60, %62, %cst_24 {dimension_numbers = #tpu.dot_dimension_numbers<[1], [1], [0], [0], [0, 0, 1, 0], [], []>} : vector<8x8xbf16>, vector<8x8xbf16>, vector<8x8xf32> -> vector<8x8xf32>
    %cst_25 = arith.constant -9.99999984E+17 : f32
    %66 = vector.shape_cast %35 : vector<1x8xi1> to vector<1x8xi1>
    %67 = vector.broadcast %66 : vector<1x8xi1> to vector<8x8xi1>
    %68 = vector.broadcast %cst_25 : f32 to vector<8x8xf32>
    %69 = arith.select %67, %68, %65 : vector<8x8xi1>, vector<8x8xf32>
    %cst_26 = arith.constant dense<0xFF800000> : vector<8xf32>
    %70 = vector.multi_reduction <maximumf>, %69, %cst_26 [1] : vector<8x8xf32> to vector<8xf32>
    %71 = vector.shape_cast %70 : vector<8xf32> to vector<8x1xf32>
    %72 = vector.broadcast %71 : vector<8x1xf32> to vector<8x8xf32>
    %73 = arith.subf %69, %72 : vector<8x8xf32>
    %74 = math.exp %73 : vector<8x8xf32>
    %cst_27 = arith.constant dense<0.000000e+00> : vector<8xf32>
    %75 = vector.multi_reduction <add>, %74, %cst_27 [1] : vector<8x8xf32> to vector<8xf32>
    %76 = vector.shape_cast %75 : vector<8xf32> to vector<8x1xf32>
    %77 = arith.truncf %74 : vector<8x8xf32> to vector<8x8xbf16>
    %cst_28 = arith.constant dense<0.000000e+00> : vector<8x8xf32>
    %78 = tpu.matmul %77, %64, %cst_28 {dimension_numbers = #tpu.dot_dimension_numbers<[1], [0], [0], [1], [0, 0, 1, 1], [], []>} : vector<8x8xbf16>, vector<8x8xbf16>, vector<8x8xf32> -> vector<8x8xf32>
    %79 = tpu.reciprocal %76 {approx = true} : vector<8x1xf32> -> vector<8x1xf32>
    %80 = vector.broadcast %79 : vector<8x1xf32> to vector<8x8xf32>
    %81 = arith.mulf %78, %80 : vector<8x8xf32>
    %82 = vector.extract_strided_slice %31 {offsets = [0, 16], sizes = [8, 8], strides = [1, 1]} : vector<8x96xf32> to vector<8x8xf32>
    %83 = arith.truncf %82 : vector<8x8xf32> to vector<8x8xbf16>
    %84 = vector.extract_strided_slice %31 {offsets = [0, 48], sizes = [8, 8], strides = [1, 1]} : vector<8x96xf32> to vector<8x8xf32>
    %85 = arith.truncf %84 : vector<8x8xf32> to vector<8x8xbf16>
    %86 = vector.extract_strided_slice %31 {offsets = [0, 80], sizes = [8, 8], strides = [1, 1]} : vector<8x96xf32> to vector<8x8xf32>
    %87 = arith.truncf %86 : vector<8x8xf32> to vector<8x8xbf16>
    %cst_29 = arith.constant dense<0.000000e+00> : vector<8x8xf32>
    %88 = tpu.matmul %83, %85, %cst_29 {dimension_numbers = #tpu.dot_dimension_numbers<[1], [1], [0], [0], [0, 0, 1, 0], [], []>} : vector<8x8xbf16>, vector<8x8xbf16>, vector<8x8xf32> -> vector<8x8xf32>
    %cst_30 = arith.constant -9.99999984E+17 : f32
    %89 = vector.shape_cast %35 : vector<1x8xi1> to vector<1x8xi1>
    %90 = vector.broadcast %89 : vector<1x8xi1> to vector<8x8xi1>
    %91 = vector.broadcast %cst_30 : f32 to vector<8x8xf32>
    %92 = arith.select %90, %91, %88 : vector<8x8xi1>, vector<8x8xf32>
    %cst_31 = arith.constant dense<0xFF800000> : vector<8xf32>
    %93 = vector.multi_reduction <maximumf>, %92, %cst_31 [1] : vector<8x8xf32> to vector<8xf32>
    %94 = vector.shape_cast %93 : vector<8xf32> to vector<8x1xf32>
    %95 = vector.broadcast %94 : vector<8x1xf32> to vector<8x8xf32>
    %96 = arith.subf %92, %95 : vector<8x8xf32>
    %97 = math.exp %96 : vector<8x8xf32>
    %cst_32 = arith.constant dense<0.000000e+00> : vector<8xf32>
    %98 = vector.multi_reduction <add>, %97, %cst_32 [1] : vector<8x8xf32> to vector<8xf32>
    %99 = vector.shape_cast %98 : vector<8xf32> to vector<8x1xf32>
    %100 = arith.truncf %97 : vector<8x8xf32> to vector<8x8xbf16>
    %cst_33 = arith.constant dense<0.000000e+00> : vector<8x8xf32>
    %101 = tpu.matmul %100, %87, %cst_33 {dimension_numbers = #tpu.dot_dimension_numbers<[1], [0], [0], [1], [0, 0, 1, 1], [], []>} : vector<8x8xbf16>, vector<8x8xbf16>, vector<8x8xf32> -> vector<8x8xf32>
    %102 = tpu.reciprocal %99 {approx = true} : vector<8x1xf32> -> vector<8x1xf32>
    %103 = vector.broadcast %102 : vector<8x1xf32> to vector<8x8xf32>
    %104 = arith.mulf %101, %103 : vector<8x8xf32>
    %105 = vector.extract_strided_slice %31 {offsets = [0, 24], sizes = [8, 8], strides = [1, 1]} : vector<8x96xf32> to vector<8x8xf32>
    %106 = arith.truncf %105 : vector<8x8xf32> to vector<8x8xbf16>
    %107 = vector.extract_strided_slice %31 {offsets = [0, 56], sizes = [8, 8], strides = [1, 1]} : vector<8x96xf32> to vector<8x8xf32>
    %108 = arith.truncf %107 : vector<8x8xf32> to vector<8x8xbf16>
    %109 = vector.extract_strided_slice %31 {offsets = [0, 88], sizes = [8, 8], strides = [1, 1]} : vector<8x96xf32> to vector<8x8xf32>
    %110 = arith.truncf %109 : vector<8x8xf32> to vector<8x8xbf16>
    %cst_34 = arith.constant dense<0.000000e+00> : vector<8x8xf32>
    %111 = tpu.matmul %106, %108, %cst_34 {dimension_numbers = #tpu.dot_dimension_numbers<[1], [1], [0], [0], [0, 0, 1, 0], [], []>} : vector<8x8xbf16>, vector<8x8xbf16>, vector<8x8xf32> -> vector<8x8xf32>
    %cst_35 = arith.constant -9.99999984E+17 : f32
    %112 = vector.shape_cast %35 : vector<1x8xi1> to vector<1x8xi1>
    %113 = vector.broadcast %112 : vector<1x8xi1> to vector<8x8xi1>
    %114 = vector.broadcast %cst_35 : f32 to vector<8x8xf32>
    %115 = arith.select %113, %114, %111 : vector<8x8xi1>, vector<8x8xf32>
    %cst_36 = arith.constant dense<0xFF800000> : vector<8xf32>
    %116 = vector.multi_reduction <maximumf>, %115, %cst_36 [1] : vector<8x8xf32> to vector<8xf32>
    %117 = vector.shape_cast %116 : vector<8xf32> to vector<8x1xf32>
    %118 = vector.broadcast %117 : vector<8x1xf32> to vector<8x8xf32>
    %119 = arith.subf %115, %118 : vector<8x8xf32>
    %120 = math.exp %119 : vector<8x8xf32>
    %cst_37 = arith.constant dense<0.000000e+00> : vector<8xf32>
    %121 = vector.multi_reduction <add>, %120, %cst_37 [1] : vector<8x8xf32> to vector<8xf32>
    %122 = vector.shape_cast %121 : vector<8xf32> to vector<8x1xf32>
    %123 = arith.truncf %120 : vector<8x8xf32> to vector<8x8xbf16>
    %cst_38 = arith.constant dense<0.000000e+00> : vector<8x8xf32>
    %124 = tpu.matmul %123, %110, %cst_38 {dimension_numbers = #tpu.dot_dimension_numbers<[1], [0], [0], [1], [0, 0, 1, 1], [], []>} : vector<8x8xbf16>, vector<8x8xbf16>, vector<8x8xf32> -> vector<8x8xf32>
    %125 = tpu.reciprocal %122 {approx = true} : vector<8x1xf32> -> vector<8x1xf32>
    %126 = vector.broadcast %125 : vector<8x1xf32> to vector<8x8xf32>
    %127 = arith.mulf %124, %126 : vector<8x8xf32>
    %128 = tpu.concatenate %58, %81, %104, %127 in 1 : vector<8x8xf32>, vector<8x8xf32>, vector<8x8xf32>, vector<8x8xf32> -> vector<8x32xf32>
    %129 = arith.truncf %128 : vector<8x32xf32> to vector<8x32xbf16>
    %c0_39 = arith.constant 0 : index
    %c0_40 = arith.constant 0 : index
    %c0_41 = arith.constant 0 : index
    %130 = vector.load %arg7[%c0_39, %c0_40, %c0_41] : memref<1x8x32xbf16, #tpu.memory_space<vmem>>, vector<1x8x32xbf16>
    %131 = vector.shape_cast %130 : vector<1x8x32xbf16> to vector<8x32xbf16>
    %132 = vector.shape_cast %129 : vector<8x32xbf16> to vector<1x8x32xbf16>
    tpu.vector_store %arg7[%c0_39, %c0_40, %c0_41], %132 {strides = array<i32>} : memref<1x8x32xbf16, #tpu.memory_space<vmem>>, vector<1x8x32xbf16>,
    return
  }
  func.func @transform_0(%arg0: i32) -> (i32, i32, i32) {
    %c0_i32 = arith.constant 0 : i32
    %c0_i32_0 = arith.constant 0 : i32
    %c0_i32_1 = arith.constant 0 : i32
    return %arg0, %c0_i32, %c0_i32_0 : i32, i32, i32
  }
  func.func @transform_1(%arg0: i32) -> (i32, i32, i32) {
    %c0_i32 = arith.constant 0 : i32
    %c0_i32_0 = arith.constant 0 : i32
    %c0_i32_1 = arith.constant 0 : i32
    return %arg0, %c0_i32, %c0_i32_0 : i32, i32, i32
  }
  func.func @transform_2(%arg0: i32) -> (i32, i32) {
    %c0_i32 = arith.constant 0 : i32
    %c0_i32_0 = arith.constant 0 : i32
    %c0_i32_1 = arith.constant 0 : i32
    return %c0_i32, %c0_i32_0 : i32, i32
  }
  func.func @transform_3(%arg0: i32) -> (i32, i32) {
    %c0_i32 = arith.constant 0 : i32
    %c0_i32_0 = arith.constant 0 : i32
    %c0_i32_1 = arith.constant 0 : i32
    return %c0_i32, %c0_i32_0 : i32, i32
  }
  func.func @transform_4(%arg0: i32) -> (i32, i32) {
    %c0_i32 = arith.constant 0 : i32
    %c0_i32_0 = arith.constant 0 : i32
    %c0_i32_1 = arith.constant 0 : i32
    return %c0_i32, %c0_i32_0 : i32, i32
  }
  func.func @transform_5(%arg0: i32) -> (i32, i32) {
    %c0_i32 = arith.constant 0 : i32
    %c0_i32_0 = arith.constant 0 : i32
    %c0_i32_1 = arith.constant 0 : i32
    return %c0_i32, %c0_i32_0 : i32, i32
  }
  func.func @transform_6(%arg0: i32) -> (i32, i32, i32) {
    %c0_i32 = arith.constant 0 : i32
    %c0_i32_0 = arith.constant 0 : i32
    %c0_i32_1 = arith.constant 0 : i32
    return %arg0, %c0_i32, %c0_i32_0 : i32, i32, i32
  }
}

</mosaic_0001>

<llo_original>
// kernel: tpu_custom_call.1
$region0: #{tpu_custom_call.1}
  #allocation0 [shape = 'u32[]', space=smem, size = 0x4, offset = 0x4, fixed_abs, tag = 'smem constant byte address 0x4 - core index']
  #allocation1 [shape = 'u32[144,128]{1,0:T(1,128)}', space=vmem, size = 0x12000, scoped, tag = 'internal scratch']
  %s0 = inlined_call_operand.hbm [shape: f32[2,8,32], index: 0, kind: input, shape index: {}]
  %s1 = inlined_call_operand.vmem [shape: f32[2,1,8], index: 1, kind: input, shape index: {}]
  %s2 = inlined_call_operand.hbm [shape: bf16[32,96], index: 2, kind: input, shape index: {}]
  %s3 = inlined_call_operand.vmem [shape: f32[1,96], index: 3, kind: input, shape index: {}]
  %s4 = inlined_call_operand.vmem [shape: f32[1,32], index: 4, kind: input, shape index: {}]
  %s5 = inlined_call_operand.vmem [shape: f32[1,32], index: 5, kind: input, shape index: {}]
  %s6 = inlined_call_operand.hbm [shape: bf16[2,8,32], index: 6, kind: output, shape index: {}]
  %s7 = sld [smem:[#allocation0]]
  $region65: #{tpu_custom_call.1} parent=0
    _
  %s9 = ssub.s32 1, %s7
  %s10 = scalar_select 0, %s9, %s7
  $region1: #{tpu_custom_call.1} parent=0
    #allocation2 [shape = 'u8[8192]{0}', space=vmem, size = 0x2000, scoped, tag = 'input window, operand 0']
    #allocation3 [shape = 's32[2]{0}', space=sflag, size = 0x8, scoped, tag = 'scoped memory for tpu_custom_call.1']
    #allocation4 [shape = 's32[2]{0}', space=sflag, size = 0x8, scoped, tag = 'scoped memory for tpu_custom_call.1']
    #allocation5 [shape = 'u8[8192]{0}', space=vmem, size = 0x2000, scoped, tag = 'input window, operand 2, single buffered']
    #allocation6 [shape = 's32[1]{0}', space=sflag, size = 0x4, scoped, tag = 'scoped memory for tpu_custom_call.1']
    #allocation7 [shape = 'u8[4096]{0}', space=vmem, size = 0x1000, scoped, tag = 'output window, operand 0']
    %11 = vsyncpa [#allocation3], 0
    %s12 = scalar_lea.sflag [#allocation3], 1
    %13 = vsyncpa %s12, 0
    %14 = vsyncpa [#allocation6], 0
    %15 = vsyncpa [#allocation4], 0
    %s16 = scalar_lea.sflag [#allocation4], 1
    %17 = vsyncpa %s16, 0
    loop: start=0, step=1, limit=4
    $region2: #{tpu_custom_call.1} parent=1 // loop_pre_header
      _
    $region3: #{tpu_custom_call.1} parent=1 // loop_header
      %s19 = sphi 0, %s23
      %p20 = scmp.ge.s32.totalorder %s19, 4
      %s29 = sphi 0, %s31
      %s32 = sphi 0, %s29
      %s33 = sphi 0, %s32
      %s49 = sphi 0, %s33
      %s55 = sphi 0, %s57
      %s58 = sphi 0, %s55
      %s59 = sphi 0, %s58
      %s75 = sphi 0, %s59
      %s79 = sphi 0, %s79
      %s81 = sphi 0, %s79
      %s82 = sphi 0, %s81
      %s96 = sphi 0, %s82
      %s100 = sphi 0, %s100
      %s102 = sphi 0, %s100
      %s103 = sphi 0, %s102
      %s117 = sphi 0, %s103
      %s121 = sphi 0, %s121
      %s123 = sphi 0, %s121
      %s124 = sphi 0, %s123
      %s138 = sphi 0, %s124
      %s142 = sphi 0, %s142
      %s144 = sphi 0, %s142
      %s145 = sphi 0, %s144
      %s159 = sphi 0, %s145
      %s165 = sphi 0, %s167
      %s168 = sphi 0, %s165
      %s169 = sphi 0, %s168
      %s185 = sphi 0, %s169
    $region4: #{tpu_custom_call.1} parent=1 // loop_header_branch
      %22 = sbr.rel (%p20) target = $region8
    $region5: #{tpu_custom_call.1} parent=1 // loop_body
      %s24 = ssub.s32 %s19, 1
      %s25 = ssub.s32 %s19, 2
      %s26 = sadd.s32 %s19, 1
      %s27 = ssub.s32 %s19, %s26
      %p28 = scmp.eq.s32.totalorder %s27, 0
      %s30 = sadd.s32 %s29, 1
      %s31 = scalar_select %p28, %s29, %s30
      %p34 = pneg %p28
      %p35 = scmp.eq.s32.totalorder %s19, 1
      %p36 = por %p34, %p35
      %p37 = scmp.ne.s32.totalorder %s29, %s32
      %p38 = scmp.eq.s32.totalorder %s19, 0
      %p39 = por %p37, %p38
      %p40 = scmp.ne.s32.totalorder %s29, %s32
      %p41 = scmp.eq.s32.totalorder %s24, 1
      %p42 = por %p40, %p41
      %p43 = scmp.ne.s32.totalorder %s32, %s33
      %p44 = scmp.eq.s32.totalorder %s24, 0
      %p45 = por %p43, %p44
      %p46 = scmp.ne.s32.totalorder %s32, %s33
      %p47 = scmp.eq.s32.totalorder %s25, 1
      %p48 = por %p46, %p47
      %p50 = scmp.ne.s32.totalorder %s33, %s49
      %p51 = scmp.eq.s32.totalorder %s25, 0
      %p52 = por %p50, %p51
      %s53 = ssub.s32 %s19, %s26
      %p54 = scmp.eq.s32.totalorder %s53, 0
      %s56 = sadd.s32 %s55, 1
      %s57 = scalar_select %p54, %s55, %s56
      %p60 = pneg %p54
      %p61 = scmp.eq.s32.totalorder %s19, 1
      %p62 = por %p60, %p61
      %p63 = scmp.ne.s32.totalorder %s55, %s58
      %p64 = scmp.eq.s32.totalorder %s19, 0
      %p65 = por %p63, %p64
      %p66 = scmp.ne.s32.totalorder %s55, %s58
      %p67 = scmp.eq.s32.totalorder %s24, 1
      %p68 = por %p66, %p67
      %p69 = scmp.ne.s32.totalorder %s58, %s59
      %p70 = scmp.eq.s32.totalorder %s24, 0
      %p71 = por %p69, %p70
      %p72 = scmp.ne.s32.totalorder %s58, %s59
      %p73 = scmp.eq.s32.totalorder %s25, 1
      %p74 = por %p72, %p73
      %p76 = scmp.ne.s32.totalorder %s59, %s75
      %p77 = scmp.eq.s32.totalorder %s25, 0
      %p78 = por %p76, %p77
      %s80 = sadd.s32 %s79, 1
      %p83 = scmp.eq.s32.totalorder %s19, 1
      %p84 = scmp.ne.s32.totalorder %s79, %s81
      %p85 = scmp.eq.s32.totalorder %s19, 0
      %p86 = por %p84, %p85
      %p87 = scmp.ne.s32.totalorder %s79, %s81
      %p88 = scmp.eq.s32.totalorder %s24, 1
      %p89 = por %p87, %p88
      %p90 = scmp.ne.s32.totalorder %s81, %s82
      %p91 = scmp.eq.s32.totalorder %s24, 0
      %p92 = por %p90, %p91
      %p93 = scmp.ne.s32.totalorder %s81, %s82
      %p94 = scmp.eq.s32.totalorder %s25, 1
      %p95 = por %p93, %p94
      %p97 = scmp.ne.s32.totalorder %s82, %s96
      %p98 = scmp.eq.s32.totalorder %s25, 0
      %p99 = por %p97, %p98
      %s101 = sadd.s32 %s100, 1
      %p104 = scmp.eq.s32.totalorder %s19, 1
      %p105 = scmp.ne.s32.totalorder %s100, %s102
      %p106 = scmp.eq.s32.totalorder %s19, 0
      %p107 = por %p105, %p106
      %p108 = scmp.ne.s32.totalorder %s100, %s102
      %p109 = scmp.eq.s32.totalorder %s24, 1
      %p110 = por %p108, %p109
      %p111 = scmp.ne.s32.totalorder %s102, %s103
      %p112 = scmp.eq.s32.totalorder %s24, 0
      %p113 = por %p111, %p112
      %p114 = scmp.ne.s32.totalorder %s102, %s103
      %p115 = scmp.eq.s32.totalorder %s25, 1
      %p116 = por %p114, %p115
      %p118 = scmp.ne.s32.totalorder %s103, %s117
      %p119 = scmp.eq.s32.totalorder %s25, 0
      %p120 = por %p118, %p119
      %s122 = sadd.s32 %s121, 1
      %p125 = scmp.eq.s32.totalorder %s19, 1
      %p126 = scmp.ne.s32.totalorder %s121, %s123
      %p127 = scmp.eq.s32.totalorder %s19, 0
      %p128 = por %p126, %p127
      %p129 = scmp.ne.s32.totalorder %s121, %s123
      %p130 = scmp.eq.s32.totalorder %s24, 1
      %p131 = por %p129, %p130
      %p132 = scmp.ne.s32.totalorder %s123, %s124
      %p133 = scmp.eq.s32.totalorder %s24, 0
      %p134 = por %p132, %p133
      %p135 = scmp.ne.s32.totalorder %s123, %s124
      %p136 = scmp.eq.s32.totalorder %s25, 1
      %p137 = por %p135, %p136
      %p139 = scmp.ne.s32.totalorder %s124, %s138
      %p140 = scmp.eq.s32.totalorder %s25, 0
      %p141 = por %p139, %p140
      %s143 = sadd.s32 %s142, 1
      %p146 = scmp.eq.s32.totalorder %s19, 1
      %p147 = scmp.ne.s32.totalorder %s142, %s144
      %p148 = scmp.eq.s32.totalorder %s19, 0
      %p149 = por %p147, %p148
      %p150 = scmp.ne.s32.totalorder %s142, %s144
      %p151 = scmp.eq.s32.totalorder %s24, 1
      %p152 = por %p150, %p151
      %p153 = scmp.ne.s32.totalorder %s144, %s145
      %p154 = scmp.eq.s32.totalorder %s24, 0
      %p155 = por %p153, %p154
      %p156 = scmp.ne.s32.totalorder %s144, %s145
      %p157 = scmp.eq.s32.totalorder %s25, 1
      %p158 = por %p156, %p157
      %p160 = scmp.ne.s32.totalorder %s145, %s159
      %p161 = scmp.eq.s32.totalorder %s25, 0
      %p162 = por %p160, %p161
      %s163 = ssub.s32 %s19, %s26
      %p164 = scmp.eq.s32.totalorder %s163, 0
      %s166 = sadd.s32 %s165, 1
      %s167 = scalar_select %p164, %s165, %s166
      %p170 = pneg %p164
      %p171 = scmp.eq.s32.totalorder %s19, 1
      %p172 = por %p170, %p171
      %p173 = scmp.ne.s32.totalorder %s165, %s168
      %p174 = scmp.eq.s32.totalorder %s19, 0
      %p175 = por %p173, %p174
      %p176 = scmp.ne.s32.totalorder %s165, %s168
      %p177 = scmp.eq.s32.totalorder %s24, 1
      %p178 = por %p176, %p177
      %p179 = scmp.ne.s32.totalorder %s168, %s169
      %p180 = scmp.eq.s32.totalorder %s24, 0
      %p181 = por %p179, %p180
      %p182 = scmp.ne.s32.totalorder %s168, %s169
      %p183 = scmp.eq.s32.totalorder %s25, 1
      %p184 = por %p182, %p183
      %p186 = scmp.ne.s32.totalorder %s169, %s185
      %p187 = scmp.eq.s32.totalorder %s25, 0
      %p188 = por %p186, %p187
      %p189 = scmp.le.s32.totalorder 1, %s19
      %p190 = scmp.lt.s32.totalorder %s19, 3
      %p191 = pnand %p189, %p190
      %p192 = pneg %p191
      // Predicated region
      $region9: #{tpu_custom_call.1} parent=5 // pred_check
        _
      $region10: #{tpu_custom_call.1} parent=5 // pred_check_branch
        %194 = sbr.rel (%p191) target = $region12
      $region11: #{tpu_custom_call.1} parent=5 // pred_region
        %s195 = ssub.s32 %s19, 1
        // Predicated region
        $region13: #{tpu_custom_call.1} parent=11 // pred_check
          %p196 = pneg %p92
        $region14: #{tpu_custom_call.1} parent=11 // pred_check_branch
          %198 = sbr.rel (%p196) target = $region16
        $region15: #{tpu_custom_call.1} parent=11 // pred_region
          %s200 = ssub.s32 256, 256
          %201 = vsyncadd [#allocation6], %s200
          %s202 = sshll.u32 [#allocation5], 4
          %s203 = int_to_ptr.vmem [resolvable:$true] %s202
          %208 = dma.hbm_to_vmem [thread:$0]  %s2, 256, %s203, [#allocation6], 64, 64, 4
        $region16: #{tpu_custom_call.1} parent=11 // pred_fallthru
          _
        // Predicated region
        $region17: #{tpu_custom_call.1} parent=11 // pred_check
          %p209 = pneg %p113
        $region18: #{tpu_custom_call.1} parent=11 // pred_check_branch
          %211 = sbr.rel (%p209) target = $region20
        $region19: #{tpu_custom_call.1} parent=11 // pred_region
          _
        $region20: #{tpu_custom_call.1} parent=11 // pred_fallthru
          _
        // Predicated region
        $region21: #{tpu_custom_call.1} parent=11 // pred_check
          %p212 = pneg %p134
        $region22: #{tpu_custom_call.1} parent=11 // pred_check_branch
          %214 = sbr.rel (%p212) target = $region24
        $region23: #{tpu_custom_call.1} parent=11 // pred_region
          _
        $region24: #{tpu_custom_call.1} parent=11 // pred_fallthru
          _
        // Predicated region
        $region25: #{tpu_custom_call.1} parent=11 // pred_check
          %p215 = pneg %p155
        $region26: #{tpu_custom_call.1} parent=11 // pred_check_branch
          %217 = sbr.rel (%p215) target = $region28
        $region27: #{tpu_custom_call.1} parent=11 // pred_region
          _
        $region28: #{tpu_custom_call.1} parent=11 // pred_fallthru
          _
      $region12: #{tpu_custom_call.1} parent=5 // pred_fallthru
        _
      %p218 = scmp.lt.s32.totalorder %s19, 2
      // Predicated region
      $region29: #{tpu_custom_call.1} parent=5 // pred_check
        %p219 = pneg %p218
      $region30: #{tpu_custom_call.1} parent=5 // pred_check_branch
        %221 = sbr.rel (%p219) target = $region32
      $region31: #{tpu_custom_call.1} parent=5 // pred_region
        // Predicated region
        $region33: #{tpu_custom_call.1} parent=31 // pred_check
          %p222 = pneg %p39
        $region34: #{tpu_custom_call.1} parent=31 // pred_check_branch
          %224 = sbr.rel (%p222) target = $region36
        $region35: #{tpu_custom_call.1} parent=31 // pred_region
          %s225 = sand.u32 %s29, 1
          %s226 = scalar_lea.sflag [#allocation3], %s225
          %s227 = sand.u32 %s29, 1
          %s228 = smul.addr %s227, 8
          %s229 = scalar_lea.vmem [#allocation2], %s228
          %s231 = ssub.s32 128, 128
          %232 = vsyncadd %s226, %s231
          %s233 = smul.addr %s19, 128
          %s234 = scalar_lea.hbm %s0, %s233
          %s236 = sshll.u32 %s229, 4
          %s237 = int_to_ptr.vmem [resolvable:$true] %s236
          %239 = dma.hbm_to_vmem [thread:$0]  %s234, 128, %s237, %s226
        $region36: #{tpu_custom_call.1} parent=31 // pred_fallthru
          _
        // Predicated region
        $region37: #{tpu_custom_call.1} parent=31 // pred_check
          %p240 = pneg %p65
        $region38: #{tpu_custom_call.1} parent=31 // pred_check_branch
          %242 = sbr.rel (%p240) target = $region40
        $region39: #{tpu_custom_call.1} parent=31 // pred_region
          %p243 = scmp.lt.s32.totalorder %s19, 1
          %s244 = scalar_select %p243, %s19, 1
          %s245 = scalar_lea.vmem %s1, %s244
        $region40: #{tpu_custom_call.1} parent=31 // pred_fallthru
          _
      $region32: #{tpu_custom_call.1} parent=5 // pred_fallthru
        _
      %p246 = scmp.le.s32.totalorder 1, %s19
      %p247 = scmp.lt.s32.totalorder %s19, 3
      %p248 = pnand %p246, %p247
      %p249 = pneg %p248
      // Predicated region
      $region41: #{tpu_custom_call.1} parent=5 // pred_check
        _
      $region42: #{tpu_custom_call.1} parent=5 // pred_check_branch
        %251 = sbr.rel (%p248) target = $region44
      $region43: #{tpu_custom_call.1} parent=5 // pred_region
        %s252 = ssub.s32 %s19, 1
        %s253 = sand.u32 %s32, 1
        %s254 = scalar_lea.sflag [#allocation3], %s253
        %s255 = sand.u32 %s32, 1
        %s256 = smul.addr %s255, 8
        %s257 = scalar_lea.vmem [#allocation2], %s256
        // Predicated region
        $region45: #{tpu_custom_call.1} parent=43 // pred_check
          %p258 = pneg %p45
        $region46: #{tpu_custom_call.1} parent=43 // pred_check_branch
          %260 = sbr.rel (%p258) target = $region48
        $region47: #{tpu_custom_call.1} parent=43 // pred_region
          %261 = dma.done %s254, 128
        $region48: #{tpu_custom_call.1} parent=43 // pred_fallthru
          _
        // Predicated region
        $region49: #{tpu_custom_call.1} parent=43 // pred_check
          %p262 = pneg %p92
        $region50: #{tpu_custom_call.1} parent=43 // pred_check_branch
          %264 = sbr.rel (%p262) target = $region52
        $region51: #{tpu_custom_call.1} parent=43 // pred_region
          %265 = dma.done [#allocation6], 256
        $region52: #{tpu_custom_call.1} parent=43 // pred_fallthru
          _
        %s266 = sand.u32 %s32, 1
        %s267 = scalar_lea.sflag [#allocation3], %s266
        %s268 = sand.u32 %s32, 1
        %s269 = smul.addr %s268, 8
        %s270 = scalar_lea.vmem [#allocation2], %s269
        %p271 = pneg %p45
        %p272 = pneg %p42
        %p273 = scmp.lt.s32.totalorder %s24, 1
        %s274 = scalar_select %p273, %s24, 1
        %s275 = scalar_lea.vmem %s1, %s274
        %p276 = pneg %p71
        %p277 = pneg %p68
        %p278 = pneg %p92
        %p279 = pneg %p89
        %p280 = pneg %p113
        %p281 = pneg %p110
        %p282 = pneg %p134
        %p283 = pneg %p131
        %p284 = pneg %p155
        %p285 = pneg %p152
        %p286 = pneg %p181
        %p287 = pneg %p178
        %s288 = sand.u32 %s168, 1
        %s289 = scalar_lea.sflag [#allocation4], %s288
        %s290 = sand.u32 %s168, 1
        %s291 = smul.addr %s290, 4
        %s292 = scalar_lea.vmem [#allocation7], %s291
        %p293 = scmp.lt.s32.totalorder %s24, 1
        %s294 = scalar_select %p293, %s24, 1
        %s295 = scalar_lea.vmem %s1, %s294
        %v297 = vld [vmem:[%s257] sm:$0xff]
        %vm298 = vcmask 261120
        %v299 = vsel %vm298, %v297, 0.0
        %300 = vadd.xlane.f32.xlu0 %v299
        %v301 = vpop.xlane.xlu0 %300
        %v302 = vrcp.pop 32.0
        %v303 = vmul.f32 %v301, %v302
        %v304 = vsub.f32 %v297, %v303
        %v305 = vmul.f32 %v304, %v304
        %v306 = vsel %vm298, %v305, 0.0
        %307 = vadd.xlane.f32.xlu0 %v306
        %v308 = vpop.xlane.xlu0 %307
        %v309 = vmul.f32 %v308, %v302
        %v310 = vadd.f32 %v309, 1e-06
        %v311 = vrsqrt.pop %v310
        %v312 = vmul.f32 %v304, %v311
        %v313 = vld [vmem:[%s4] sm:$0x1]
        %v315 = vlaneseq
        %v316 = vshrl.u32 %v315, 7
        %v317 = vsub.s32 0, %v316
        %v318 = vrot.slane %v313, %v317
        %v320 = vmul.f32 %v312, %v318
        %v321 = vld [vmem:[%s5] sm:$0x1]
        %v323 = vlaneseq
        %v324 = vshrl.u32 %v323, 7
        %v325 = vsub.s32 0, %v324
        %v326 = vrot.slane %v321, %v325
        %v328 = vadd.f32 %v320, %v326
        %v329 = vpack.c.bf16 %v328, %v328
        %v330 = vld [vmem:[#allocation5] sm:$0xf]
        %v331 = vld [vmem:[#allocation5 + $0x4] sm:$0xf]
        %v332 = vld [vmem:[#allocation5 + $0x8] sm:$0xf]
        %v333 = vld [vmem:[#allocation5 + $0xc] sm:$0xf]
        %v334 = vld [vmem:[%s3] sm:$0x1]
        %v336 = vlaneseq
        %v337 = vshrl.u32 %v336, 7
        %v338 = vsub.s32 0, %v337
        %v339 = vrot.slane %v334, %v338
        %v345 = vunpack.c.l.b16 %v330
        %v346 = vunpack.c.l.b16 %v331
        %v347 = vunpack.c.l.b16 %v332
        %v348 = vunpack.c.l.b16 %v333
        %v349 = vpack.c.b16 %v346, %v345
        %v350 = vpack.c.b16 %v348, %v347
        %v354 = vsel %vm298, %v329, 0
        %356 = vmatprep.subr.bf16.mxu0 0
        %357 = vmatpush1.bf16.msra.mxu0 %v349
        %358 = vmatprep.subr.bf16.mxu0 0
        %359 = vmatpush1.bf16.msra.mxu0 %v350
        %360 = vmatprep.subr.bf16.mxu0 0
        %361 = vmatpush1.bf16.msra.mxu0 0
        %362 = vmatprep.subr.bf16.mxu0 0
        %363 = vmatpush1.bf16.msra.mxu0 0
        %364 = vmatprep.subr.bf16.mxu0 0
        %365 = vmatpush1.bf16.msra.mxu0 0
        %366 = vmatprep.subr.bf16.mxu0 0
        %367 = vmatpush1.bf16.msra.mxu0 0
        %368 = vmatprep.subr.bf16.mxu0 0
        %369 = vmatpush1.bf16.msra.mxu0 0
        %370 = vmatprep.subr.bf16.mxu0 0
        %371 = vmatpush1.bf16.msra.mxu0 0
        %372 = vmatprep.subr.bf16.mxu0 0
        %373 = vmatpush1.bf16.msra.mxu0 0
        %374 = vmatprep.subr.bf16.mxu0 0
        %375 = vmatpush1.bf16.msra.mxu0 0
        %376 = vmatprep.subr.bf16.mxu0 0
        %377 = vmatpush1.bf16.msra.mxu0 0
        %378 = vmatprep.subr.bf16.mxu0 0
        %379 = vmatpush1.bf16.msra.mxu0 0
        %380 = vmatprep.subr.bf16.mxu0 0
        %381 = vmatpush1.bf16.msra.mxu0 0
        %382 = vmatprep.subr.bf16.mxu0 0
        %383 = vmatpush1.bf16.msra.mxu0 0
        %384 = vmatprep.subr.bf16.mxu0 0
        %385 = vmatpush1.bf16.msra.mxu0 0
        %386 = vmatprep.subr.bf16.mxu0 0
        %387 = vmatpush1.bf16.msra.mxu0 0
        %388 = vmatprep.mubr.bf16.mxu0 0
        %389 = vmatmul.mubr.bf16.gmra.mrb[0].mxu0 %v354
        %v390 = vpop.f32.mrb[0].mxu0
        %v391 = vadd.f32 %v339, %v390
        %v392 = vpop.f32.mrb[0].mxu0
        %v393 = vpop.f32.mrb[0].mxu0
        %v394 = vpop.f32.mrb[0].mxu0
        %395 = vdwg.mxu0
        %v396 = vld [vmem:[%s295] sm:$0x1]
        %vm397 = vcmp.gt.f32.partialorder %v396, 0.5
        %v398 = vpack.c.bf16 %v391, %v391
        %400 = vrot.lane.b32.xlu0 %v398, 96
        %v401 = vpop.permute.xlu0 %400
        %vm402 = vcmask 64512
        %v404 = vsel %vm402, %v398, 0
        %v407 = vsel %vm402, %v401, 0
        %409 = vmatprep.subr.bf16.mxu0 0
        %410 = vmatpush1.bf16.xpose.msra.mxu0 %v407
        %411 = vmatprep.subr.bf16.mxu0 0
        %412 = vmatpush1.bf16.xpose.msra.mxu0 0
        %413 = vmatprep.subr.bf16.mxu0 0
        %414 = vmatpush1.bf16.xpose.msra.mxu0 0
        %415 = vmatprep.subr.bf16.mxu0 0
        %416 = vmatpush1.bf16.xpose.msra.mxu0 0
        %417 = vmatprep.subr.bf16.mxu0 0
        %418 = vmatpush1.bf16.xpose.msra.mxu0 0
        %419 = vmatprep.subr.bf16.mxu0 0
        %420 = vmatpush1.bf16.xpose.msra.mxu0 0
        %421 = vmatprep.subr.bf16.mxu0 0
        %422 = vmatpush1.bf16.xpose.msra.mxu0 0
        %423 = vmatprep.subr.bf16.mxu0 0
        %424 = vmatpush1.bf16.xpose.msra.mxu0 0
        %425 = vmatprep.subr.bf16.mxu0 0
        %426 = vmatpush1.bf16.xpose.msra.mxu0 0
        %427 = vmatprep.subr.bf16.mxu0 0
        %428 = vmatpush1.bf16.xpose.msra.mxu0 0
        %429 = vmatprep.subr.bf16.mxu0 0
        %430 = vmatpush1.bf16.xpose.msra.mxu0 0
        %431 = vmatprep.subr.bf16.mxu0 0
        %432 = vmatpush1.bf16.xpose.msra.mxu0 0
        %433 = vmatprep.subr.bf16.mxu0 0
        %434 = vmatpush1.bf16.xpose.msra.mxu0 0
        %435 = vmatprep.subr.bf16.mxu0 0
        %436 = vmatpush1.bf16.xpose.msra.mxu0 0
        %437 = vmatprep.subr.bf16.mxu0 0
        %438 = vmatpush1.bf16.xpose.msra.mxu0 0
        %439 = vmatprep.subr.bf16.mxu0 0
        %440 = vmatpush1.bf16.xpose.msra.mxu0 0
        %441 = vmatprep.mubr.bf16.mxu0 0
        %442 = vmatmul.mubr.bf16.gmra.mrb[0].mxu0 %v404
        %v443 = vpop.f32.mrb[0].mxu0
        %v444 = vadd.f32 0.0, %v443
        %v445 = vpop.f32.mrb[0].mxu0
        %v446 = vpop.f32.mrb[0].mxu0
        %v447 = vpop.f32.mrb[0].mxu0
        %448 = vdwg.mxu0
        %v449 = vsel %vm397, 1, 0
        %v450 = vlaneseq
        %v451 = vshrl.u32 %v450, 7
        %v452 = vsub.s32 0, %v451
        %v453 = vrot.slane %v449, %v452
        %vm454 = vcmp.eq.s32.totalorder %v453, 1
        %v455 = vsel %vm454, -1e+18, %v444
        %v456 = vsel %vm402, %v455, -inf
        %457 = vmax.xlane.f32.xlu0 %v456
        %v458 = vpop.xlane.xlu0 %457
        %v459 = vsub.f32 %v455, %v458
        %v460 = vmul.f32 %v459, 1.442695
        %v461 = vpow.pop %v460
        %v462 = vsel %vm402, %v461, 0.0
        %463 = vadd.xlane.f32.xlu0 %v462
        %v464 = vpop.xlane.xlu0 %463
        %v465 = vpack.c.bf16 %v461, %v461
        %466 = vrot.lane.b32.xlu0 %v398, 64
        %v467 = vpop.permute.xlu0 %466
        %v469 = vsel %vm402, %v465, 0
        %vm471 = vcmask 1043456
        %v473 = vsel %vm471, %v467, 0
        %475 = vmatprep.subr.bf16.mxu0 0
        %476 = vmatpush1.bf16.msra.mxu0 %v473
        %477 = vmatprep.subr.bf16.mxu0 0
        %478 = vmatpush1.bf16.msra.mxu0 0
        %479 = vmatprep.subr.bf16.mxu0 0
        %480 = vmatpush1.bf16.msra.mxu0 0
        %481 = vmatprep.subr.bf16.mxu0 0
        %482 = vmatpush1.bf16.msra.mxu0 0
        %483 = vmatprep.subr.bf16.mxu0 0
        %484 = vmatpush1.bf16.msra.mxu0 0
        %485 = vmatprep.subr.bf16.mxu0 0
        %486 = vmatpush1.bf16.msra.mxu0 0
        %487 = vmatprep.subr.bf16.mxu0 0
        %488 = vmatpush1.bf16.msra.mxu0 0
        %489 = vmatprep.subr.bf16.mxu0 0
        %490 = vmatpush1.bf16.msra.mxu0 0
        %491 = vmatprep.subr.bf16.mxu0 0
        %492 = vmatpush1.bf16.msra.mxu0 0
        %493 = vmatprep.subr.bf16.mxu0 0
        %494 = vmatpush1.bf16.msra.mxu0 0
        %495 = vmatprep.subr.bf16.mxu0 0
        %496 = vmatpush1.bf16.msra.mxu0 0
        %497 = vmatprep.subr.bf16.mxu0 0
        %498 = vmatpush1.bf16.msra.mxu0 0
        %499 = vmatprep.subr.bf16.mxu0 0
        %500 = vmatpush1.bf16.msra.mxu0 0
        %501 = vmatprep.subr.bf16.mxu0 0
        %502 = vmatpush1.bf16.msra.mxu0 0
        %503 = vmatprep.subr.bf16.mxu0 0
        %504 = vmatpush1.bf16.msra.mxu0 0
        %505 = vmatprep.subr.bf16.mxu0 0
        %506 = vmatpush1.bf16.msra.mxu0 0
        %507 = vmatprep.mubr.bf16.mxu0 0
        %508 = vmatmul.mubr.bf16.gmra.mrb[0].mxu0 %v469
        %v509 = vpop.f32.mrb[0].mxu0
        %v510 = vadd.f32 0.0, %v509
        %v511 = vpop.f32.mrb[0].mxu0
        %v512 = vpop.f32.mrb[0].mxu0
        %v513 = vpop.f32.mrb[0].mxu0
        %514 = vdwg.mxu0
        %v515 = vrcp.pop %v464
        %v516 = vmul.f32 %v510, %v515
        %517 = vrot.lane.b32.xlu0 %v398, 120
        %v518 = vpop.permute.xlu0 %517
        %519 = vrot.lane.b32.xlu0 %v398, 88
        %v520 = vpop.permute.xlu0 %519
        %v522 = vsel %vm402, %v518, 0
        %v525 = vsel %vm402, %v520, 0
        %527 = vmatprep.subr.bf16.mxu0 0
        %528 = vmatpush1.bf16.xpose.msra.mxu0 %v525
        %529 = vmatprep.subr.bf16.mxu0 0
        %530 = vmatpush1.bf16.xpose.msra.mxu0 0
        %531 = vmatprep.subr.bf16.mxu0 0
        %532 = vmatpush1.bf16.xpose.msra.mxu0 0
        %533 = vmatprep.subr.bf16.mxu0 0
        %534 = vmatpush1.bf16.xpose.msra.mxu0 0
        %535 = vmatprep.subr.bf16.mxu0 0
        %536 = vmatpush1.bf16.xpose.msra.mxu0 0
        %537 = vmatprep.subr.bf16.mxu0 0
        %538 = vmatpush1.bf16.xpose.msra.mxu0 0
        %539 = vmatprep.subr.bf16.mxu0 0
        %540 = vmatpush1.bf16.xpose.msra.mxu0 0
        %541 = vmatprep.subr.bf16.mxu0 0
        %542 = vmatpush1.bf16.xpose.msra.mxu0 0
        %543 = vmatprep.subr.bf16.mxu0 0
        %544 = vmatpush1.bf16.xpose.msra.mxu0 0
        %545 = vmatprep.subr.bf16.mxu0 0
        %546 = vmatpush1.bf16.xpose.msra.mxu0 0
        %547 = vmatprep.subr.bf16.mxu0 0
        %548 = vmatpush1.bf16.xpose.msra.mxu0 0
        %549 = vmatprep.subr.bf16.mxu0 0
        %550 = vmatpush1.bf16.xpose.msra.mxu0 0
        %551 = vmatprep.subr.bf16.mxu0 0
        %552 = vmatpush1.bf16.xpose.msra.mxu0 0
        %553 = vmatprep.subr.bf16.mxu0 0
        %554 = vmatpush1.bf16.xpose.msra.mxu0 0
        %555 = vmatprep.subr.bf16.mxu0 0
        %556 = vmatpush1.bf16.xpose.msra.mxu0 0
        %557 = vmatprep.subr.bf16.mxu0 0
        %558 = vmatpush1.bf16.xpose.msra.mxu0 0
        %559 = vmatprep.mubr.bf16.mxu0 0
        %560 = vmatmul.mubr.bf16.gmra.mrb[0].mxu0 %v522
        %v561 = vpop.f32.mrb[0].mxu0
        %v562 = vadd.f32 0.0, %v561
        %v563 = vpop.f32.mrb[0].mxu0
        %v564 = vpop.f32.mrb[0].mxu0
        %v565 = vpop.f32.mrb[0].mxu0
        %566 = vdwg.mxu0
        %v567 = vsel %vm454, -1e+18, %v562
        %v568 = vsel %vm402, %v567, -inf
        %569 = vmax.xlane.f32.xlu0 %v568
        %v570 = vpop.xlane.xlu0 %569
        %v571 = vsub.f32 %v567, %v570
        %v572 = vmul.f32 %v571, 1.442695
        %v573 = vpow.pop %v572
        %v574 = vsel %vm402, %v573, 0.0
        %575 = vadd.xlane.f32.xlu0 %v574
        %v576 = vpop.xlane.xlu0 %575
        %v577 = vpack.c.bf16 %v573, %v573
        %578 = vrot.lane.b32.xlu0 %v398, 56
        %v579 = vpop.permute.xlu0 %578
        %v581 = vsel %vm402, %v577, 0
        %v584 = vsel %vm471, %v579, 0
        %586 = vmatprep.subr.bf16.mxu0 0
        %587 = vmatpush1.bf16.msra.mxu0 %v584
        %588 = vmatprep.subr.bf16.mxu0 0
        %589 = vmatpush1.bf16.msra.mxu0 0
        %590 = vmatprep.subr.bf16.mxu0 0
        %591 = vmatpush1.bf16.msra.mxu0 0
        %592 = vmatprep.subr.bf16.mxu0 0
        %593 = vmatpush1.bf16.msra.mxu0 0
        %594 = vmatprep.subr.bf16.mxu0 0
        %595 = vmatpush1.bf16.msra.mxu0 0
        %596 = vmatprep.subr.bf16.mxu0 0
        %597 = vmatpush1.bf16.msra.mxu0 0
        %598 = vmatprep.subr.bf16.mxu0 0
        %599 = vmatpush1.bf16.msra.mxu0 0
        %600 = vmatprep.subr.bf16.mxu0 0
        %601 = vmatpush1.bf16.msra.mxu0 0
        %602 = vmatprep.subr.bf16.mxu0 0
        %603 = vmatpush1.bf16.msra.mxu0 0
        %604 = vmatprep.subr.bf16.mxu0 0
        %605 = vmatpush1.bf16.msra.mxu0 0
        %606 = vmatprep.subr.bf16.mxu0 0
        %607 = vmatpush1.bf16.msra.mxu0 0
        %608 = vmatprep.subr.bf16.mxu0 0
        %609 = vmatpush1.bf16.msra.mxu0 0
        %610 = vmatprep.subr.bf16.mxu0 0
        %611 = vmatpush1.bf16.msra.mxu0 0
        %612 = vmatprep.subr.bf16.mxu0 0
        %613 = vmatpush1.bf16.msra.mxu0 0
        %614 = vmatprep.subr.bf16.mxu0 0
        %615 = vmatpush1.bf16.msra.mxu0 0
        %616 = vmatprep.subr.bf16.mxu0 0
        %617 = vmatpush1.bf16.msra.mxu0 0
        %618 = vmatprep.mubr.bf16.mxu0 0
        %619 = vmatmul.mubr.bf16.gmra.mrb[0].mxu0 %v581
        %v620 = vpop.f32.mrb[0].mxu0
        %v621 = vadd.f32 0.0, %v620
        %v622 = vpop.f32.mrb[0].mxu0
        %v623 = vpop.f32.mrb[0].mxu0
        %v624 = vpop.f32.mrb[0].mxu0
        %625 = vdwg.mxu0
        %v626 = vrcp.pop %v576
        %v627 = vmul.f32 %v621, %v626
        %628 = vrot.lane.b32.xlu0 %v398, 112
        %v629 = vpop.permute.xlu0 %628
        %630 = vrot.lane.b32.xlu0 %v398, 80
        %v631 = vpop.permute.xlu0 %630
        %v633 = vsel %vm402, %v629, 0
        %v636 = vsel %vm402, %v631, 0
        %638 = vmatprep.subr.bf16.mxu0 0
        %639 = vmatpush1.bf16.xpose.msra.mxu0 %v636
        %640 = vmatprep.subr.bf16.mxu0 0
        %641 = vmatpush1.bf16.xpose.msra.mxu0 0
        %642 = vmatprep.subr.bf16.mxu0 0
        %643 = vmatpush1.bf16.xpose.msra.mxu0 0
        %644 = vmatprep.subr.bf16.mxu0 0
        %645 = vmatpush1.bf16.xpose.msra.mxu0 0
        %646 = vmatprep.subr.bf16.mxu0 0
        %647 = vmatpush1.bf16.xpose.msra.mxu0 0
        %648 = vmatprep.subr.bf16.mxu0 0
        %649 = vmatpush1.bf16.xpose.msra.mxu0 0
        %650 = vmatprep.subr.bf16.mxu0 0
        %651 = vmatpush1.bf16.xpose.msra.mxu0 0
        %652 = vmatprep.subr.bf16.mxu0 0
        %653 = vmatpush1.bf16.xpose.msra.mxu0 0
        %654 = vmatprep.subr.bf16.mxu0 0
        %655 = vmatpush1.bf16.xpose.msra.mxu0 0
        %656 = vmatprep.subr.bf16.mxu0 0
        %657 = vmatpush1.bf16.xpose.msra.mxu0 0
        %658 = vmatprep.subr.bf16.mxu0 0
        %659 = vmatpush1.bf16.xpose.msra.mxu0 0
        %660 = vmatprep.subr.bf16.mxu0 0
        %661 = vmatpush1.bf16.xpose.msra.mxu0 0
        %662 = vmatprep.subr.bf16.mxu0 0
        %663 = vmatpush1.bf16.xpose.msra.mxu0 0
        %664 = vmatprep.subr.bf16.mxu0 0
        %665 = vmatpush1.bf16.xpose.msra.mxu0 0
        %666 = vmatprep.subr.bf16.mxu0 0
        %667 = vmatpush1.bf16.xpose.msra.mxu0 0
        %668 = vmatprep.subr.bf16.mxu0 0
        %669 = vmatpush1.bf16.xpose.msra.mxu0 0
        %670 = vmatprep.mubr.bf16.mxu0 0
        %671 = vmatmul.mubr.bf16.gmra.mrb[0].mxu0 %v633
        %v672 = vpop.f32.mrb[0].mxu0
        %v673 = vadd.f32 0.0, %v672
        %v674 = vpop.f32.mrb[0].mxu0
        %v675 = vpop.f32.mrb[0].mxu0
        %v676 = vpop.f32.mrb[0].mxu0
        %677 = vdwg.mxu0
        %v678 = vsel %vm454, -1e+18, %v673
        %v679 = vsel %vm402, %v678, -inf
        %680 = vmax.xlane.f32.xlu0 %v679
        %v681 = vpop.xlane.xlu0 %680
        %v682 = vsub.f32 %v678, %v681
        %v683 = vmul.f32 %v682, 1.442695
        %v684 = vpow.pop %v683
        %v685 = vsel %vm402, %v684, 0.0
        %686 = vadd.xlane.f32.xlu0 %v685
        %v687 = vpop.xlane.xlu0 %686
        %v688 = vpack.c.bf16 %v684, %v684
        %689 = vrot.lane.b32.xlu0 %v398, 48
        %v690 = vpop.permute.xlu0 %689
        %v692 = vsel %vm402, %v688, 0
        %v695 = vsel %vm471, %v690, 0
        %697 = vmatprep.subr.bf16.mxu0 0
        %698 = vmatpush1.bf16.msra.mxu0 %v695
        %699 = vmatprep.subr.bf16.mxu0 0
        %700 = vmatpush1.bf16.msra.mxu0 0
        %701 = vmatprep.subr.bf16.mxu0 0
        %702 = vmatpush1.bf16.msra.mxu0 0
        %703 = vmatprep.subr.bf16.mxu0 0
        %704 = vmatpush1.bf16.msra.mxu0 0
        %705 = vmatprep.subr.bf16.mxu0 0
        %706 = vmatpush1.bf16.msra.mxu0 0
        %707 = vmatprep.subr.bf16.mxu0 0
        %708 = vmatpush1.bf16.msra.mxu0 0
        %709 = vmatprep.subr.bf16.mxu0 0
        %710 = vmatpush1.bf16.msra.mxu0 0
        %711 = vmatprep.subr.bf16.mxu0 0
        %712 = vmatpush1.bf16.msra.mxu0 0
        %713 = vmatprep.subr.bf16.mxu0 0
        %714 = vmatpush1.bf16.msra.mxu0 0
        %715 = vmatprep.subr.bf16.mxu0 0
        %716 = vmatpush1.bf16.msra.mxu0 0
        %717 = vmatprep.subr.bf16.mxu0 0
        %718 = vmatpush1.bf16.msra.mxu0 0
        %719 = vmatprep.subr.bf16.mxu0 0
        %720 = vmatpush1.bf16.msra.mxu0 0
        %721 = vmatprep.subr.bf16.mxu0 0
        %722 = vmatpush1.bf16.msra.mxu0 0
        %723 = vmatprep.subr.bf16.mxu0 0
        %724 = vmatpush1.bf16.msra.mxu0 0
        %725 = vmatprep.subr.bf16.mxu0 0
        %726 = vmatpush1.bf16.msra.mxu0 0
        %727 = vmatprep.subr.bf16.mxu0 0
        %728 = vmatpush1.bf16.msra.mxu0 0
        %729 = vmatprep.mubr.bf16.mxu0 0
        %730 = vmatmul.mubr.bf16.gmra.mrb[0].mxu0 %v692
        %v731 = vpop.f32.mrb[0].mxu0
        %v732 = vadd.f32 0.0, %v731
        %v733 = vpop.f32.mrb[0].mxu0
        %v734 = vpop.f32.mrb[0].mxu0
        %v735 = vpop.f32.mrb[0].mxu0
        %736 = vdwg.mxu0
        %v737 = vrcp.pop %v687
        %v738 = vmul.f32 %v732, %v737
        %739 = vrot.lane.b32.xlu0 %v398, 104
        %v740 = vpop.permute.xlu0 %739
        %741 = vrot.lane.b32.xlu0 %v398, 72
        %v742 = vpop.permute.xlu0 %741
        %v744 = vsel %vm402, %v740, 0
        %v747 = vsel %vm402, %v742, 0
        %749 = vmatprep.subr.bf16.mxu0 0
        %750 = vmatpush1.bf16.xpose.msra.mxu0 %v747
        %751 = vmatprep.subr.bf16.mxu0 0
        %752 = vmatpush1.bf16.xpose.msra.mxu0 0
        %753 = vmatprep.subr.bf16.mxu0 0
        %754 = vmatpush1.bf16.xpose.msra.mxu0 0
        %755 = vmatprep.subr.bf16.mxu0 0
        %756 = vmatpush1.bf16.xpose.msra.mxu0 0
        %757 = vmatprep.subr.bf16.mxu0 0
        %758 = vmatpush1.bf16.xpose.msra.mxu0 0
        %759 = vmatprep.subr.bf16.mxu0 0
        %760 = vmatpush1.bf16.xpose.msra.mxu0 0
        %761 = vmatprep.subr.bf16.mxu0 0
        %762 = vmatpush1.bf16.xpose.msra.mxu0 0
        %763 = vmatprep.subr.bf16.mxu0 0
        %764 = vmatpush1.bf16.xpose.msra.mxu0 0
        %765 = vmatprep.subr.bf16.mxu0 0
        %766 = vmatpush1.bf16.xpose.msra.mxu0 0
        %767 = vmatprep.subr.bf16.mxu0 0
        %768 = vmatpush1.bf16.xpose.msra.mxu0 0
        %769 = vmatprep.subr.bf16.mxu0 0
        %770 = vmatpush1.bf16.xpose.msra.mxu0 0
        %771 = vmatprep.subr.bf16.mxu0 0
        %772 = vmatpush1.bf16.xpose.msra.mxu0 0
        %773 = vmatprep.subr.bf16.mxu0 0
        %774 = vmatpush1.bf16.xpose.msra.mxu0 0
        %775 = vmatprep.subr.bf16.mxu0 0
        %776 = vmatpush1.bf16.xpose.msra.mxu0 0
        %777 = vmatprep.subr.bf16.mxu0 0
        %778 = vmatpush1.bf16.xpose.msra.mxu0 0
        %779 = vmatprep.subr.bf16.mxu0 0
        %780 = vmatpush1.bf16.xpose.msra.mxu0 0
        %781 = vmatprep.mubr.bf16.mxu0 0
        %782 = vmatmul.mubr.bf16.gmra.mrb[0].mxu0 %v744
        %v783 = vpop.f32.mrb[0].mxu0
        %v784 = vadd.f32 0.0, %v783
        %v785 = vpop.f32.mrb[0].mxu0
        %v786 = vpop.f32.mrb[0].mxu0
        %v787 = vpop.f32.mrb[0].mxu0
        %788 = vdwg.mxu0
        %v789 = vsel %vm454, -1e+18, %v784
        %v790 = vsel %vm402, %v789, -inf
        %791 = vmax.xlane.f32.xlu0 %v790
        %v792 = vpop.xlane.xlu0 %791
        %v793 = vsub.f32 %v789, %v792
        %v794 = vmul.f32 %v793, 1.442695
        %v795 = vpow.pop %v794
        %v796 = vsel %vm402, %v795, 0.0
        %797 = vadd.xlane.f32.xlu0 %v796
        %v798 = vpop.xlane.xlu0 %797
        %v799 = vpack.c.bf16 %v795, %v795
        %800 = vrot.lane.b32.xlu0 %v398, 40
        %v801 = vpop.permute.xlu0 %800
        %v803 = vsel %vm402, %v799, 0
        %v806 = vsel %vm471, %v801, 0
        %808 = vmatprep.subr.bf16.mxu0 0
        %809 = vmatpush1.bf16.msra.mxu0 %v806
        %810 = vmatprep.subr.bf16.mxu0 0
        %811 = vmatpush1.bf16.msra.mxu0 0
        %812 = vmatprep.subr.bf16.mxu0 0
        %813 = vmatpush1.bf16.msra.mxu0 0
        %814 = vmatprep.subr.bf16.mxu0 0
        %815 = vmatpush1.bf16.msra.mxu0 0
        %816 = vmatprep.subr.bf16.mxu0 0
        %817 = vmatpush1.bf16.msra.mxu0 0
        %818 = vmatprep.subr.bf16.mxu0 0
        %819 = vmatpush1.bf16.msra.mxu0 0
        %820 = vmatprep.subr.bf16.mxu0 0
        %821 = vmatpush1.bf16.msra.mxu0 0
        %822 = vmatprep.subr.bf16.mxu0 0
        %823 = vmatpush1.bf16.msra.mxu0 0
        %824 = vmatprep.subr.bf16.mxu0 0
        %825 = vmatpush1.bf16.msra.mxu0 0
        %826 = vmatprep.subr.bf16.mxu0 0
        %827 = vmatpush1.bf16.msra.mxu0 0
        %828 = vmatprep.subr.bf16.mxu0 0
        %829 = vmatpush1.bf16.msra.mxu0 0
        %830 = vmatprep.subr.bf16.mxu0 0
        %831 = vmatpush1.bf16.msra.mxu0 0
        %832 = vmatprep.subr.bf16.mxu0 0
        %833 = vmatpush1.bf16.msra.mxu0 0
        %834 = vmatprep.subr.bf16.mxu0 0
        %835 = vmatpush1.bf16.msra.mxu0 0
        %836 = vmatprep.subr.bf16.mxu0 0
        %837 = vmatpush1.bf16.msra.mxu0 0
        %838 = vmatprep.subr.bf16.mxu0 0
        %839 = vmatpush1.bf16.msra.mxu0 0
        %840 = vmatprep.mubr.bf16.mxu0 0
        %841 = vmatmul.mubr.bf16.gmra.mrb[0].mxu0 %v803
        %v842 = vpop.f32.mrb[0].mxu0
        %v843 = vadd.f32 0.0, %v842
        %v844 = vpop.f32.mrb[0].mxu0
        %v845 = vpop.f32.mrb[0].mxu0
        %v846 = vpop.f32.mrb[0].mxu0
        %847 = vdwg.mxu0
        %v848 = vrcp.pop %v798
        %v849 = vmul.f32 %v843, %v848
        %851 = vrot.lane.b32.xlu0 %v627, 8
        %v852 = vpop.permute.xlu0 %851
        %855 = vrot.lane.b32.xlu0 %v738, 16
        %v856 = vpop.permute.xlu0 %855
        %859 = vrot.lane.b32.xlu0 %v849, 24
        %v860 = vpop.permute.xlu0 %859
        %v862 = vsel %vm402, %v516, %v852
        %vm863 = vcmask 130048
        %v864 = vsel %vm863, %v862, %v856
        %vm865 = vcmask 195584
        %v866 = vsel %vm865, %v864, %v860
        %v867 = vpack.c.bf16 %v866, %v866
        %vm868 = vcmask 257024
        %869 = vst.msk [vmem:[%s292] sm:$0xf] %vm868, %v867
        %s870 = sand.u32 %s168, 1
        %s871 = scalar_lea.sflag [#allocation4], %s870
        %s872 = sand.u32 %s168, 1
        %s873 = smul.addr %s872, 4
        %s874 = scalar_lea.vmem [#allocation7], %s873
        // Predicated region
        $region53: #{tpu_custom_call.1} parent=43 // pred_check
          %p875 = pneg %p178
        $region54: #{tpu_custom_call.1} parent=43 // pred_check_branch
          %877 = sbr.rel (%p875) target = $region56
        $region55: #{tpu_custom_call.1} parent=43 // pred_region
          %s879 = ssub.s32 64, 64
          %880 = vsyncadd %s871, %s879
          %s881 = smul.addr %s24, 64
          %s882 = scalar_lea.hbm %s6, %s881
          %s884 = sshll.u32 %s874, 4
          %s885 = int_to_ptr.vmem [resolvable:$true] %s884
          %887 = dma.vmem_to_hbm [thread:$0]  %s885, 64, %s882, %s871
        $region56: #{tpu_custom_call.1} parent=43 // pred_fallthru
          _
      $region44: #{tpu_custom_call.1} parent=5 // pred_fallthru
        _
      %p888 = scmp.le.s32.totalorder 2, %s19
      // Predicated region
      $region57: #{tpu_custom_call.1} parent=5 // pred_check
        %p889 = pneg %p888
      $region58: #{tpu_custom_call.1} parent=5 // pred_check_branch
        %891 = sbr.rel (%p889) target = $region60
      $region59: #{tpu_custom_call.1} parent=5 // pred_region
        %s892 = ssub.s32 %s19, 2
        // Predicated region
        $region61: #{tpu_custom_call.1} parent=59 // pred_check
          %p893 = pneg %p184
        $region62: #{tpu_custom_call.1} parent=59 // pred_check_branch
          %895 = sbr.rel (%p893) target = $region64
        $region63: #{tpu_custom_call.1} parent=59 // pred_region
          %s896 = sand.u32 %s169, 1
          %s897 = scalar_lea.sflag [#allocation4], %s896
          %s898 = sand.u32 %s169, 1
          %s899 = smul.addr %s898, 4
          %s900 = scalar_lea.vmem [#allocation7], %s899
          %901 = dma.done %s897, 64
        $region64: #{tpu_custom_call.1} parent=59 // pred_fallthru
          _
      $region60: #{tpu_custom_call.1} parent=5 // pred_fallthru
        _
    $region6: #{tpu_custom_call.1} parent=1 // loop_footer
      %s23 = sadd.s32 1, %s19
    $region7: #{tpu_custom_call.1} parent=1 // loop_footer_branch
      %18 = sbr.rel target = $region3
    $region8: #{tpu_custom_call.1} parent=1 // loop_exit
      _
    %902 = vsyncpa [#allocation3], 1
    %s903 = scalar_lea.sflag [#allocation3], 1
    %904 = vsyncpa %s903, 1
    %905 = vsyncpa [#allocation6], 1
    %906 = vsyncpa [#allocation4], 1
    %s907 = scalar_lea.sflag [#allocation4], 1
    %908 = vsyncpa %s907, 1

</llo_original>
